<compile_context>
chip_gen: v7x
topology: tpu7x:2x2x1
jax: 0.10.0
libtpu: 0.0.40
codegen_flags: <defaults>
</compile_context>

<pallas_src>
import math
import functools

import jax
import jax.numpy as jnp
from jax.experimental import pallas as pl
from jax.experimental.pallas import tpu as pltpu

ETA = 1e-3
ACOS_SQRT_ETA = math.acos(math.sqrt(ETA))

_LANE = 128
_TILE_R_CAP = 4096          # 4096 rows * 128 lanes * 4 B = 2 MiB per f32 block
_MIN_ROW_STEPS = 4          # keep the BlockSpec pipeline >= 4 steps deep


def _vpsde_kernel(alpha_ref, sigma_ref, x_ref, eps_ref, xt_ref):
    # alpha_ref : (B,) float32 SMEM   per-sample mu(t)
    # sigma_ref : (B,) float32 SMEM   per-sample sigma(t)
    # x_ref     : (tile_r, 128) VMEM block of the clean sample (native dtype)
    # eps_ref   : (tile_r, 128) VMEM block of N(0,1) noise     (native dtype)
    # xt_ref    : (tile_r, 128) VMEM output block              (native dtype)
    b = pl.program_id(0)
    alpha = alpha_ref[b]                       # scalar, broadcast over block
    sigma = sigma_ref[b]
    x = x_ref[...].astype(jnp.float32)         # upcast in-kernel only
    eps = eps_ref[...].astype(jnp.float32)
    xt_ref[...] = (alpha * x + sigma * eps).astype(xt_ref.dtype)


def _pick_tile_r(num_rows, cap=_TILE_R_CAP, min_steps=_MIN_ROW_STEPS):
    """Row-tile: multiple of 8, <= cap, aiming for >= min_steps grid steps.

    The grid uses pl.cdiv, so the last tile may be ragged (Pallas masks it);
    no exact-divisor requirement and no oversized fallback.
    """
    if num_rows <= 8:
        return num_rows                        # full extent satisfies (8,128) rule
    target = max(8, -(-num_rows // min_steps))  # cdiv(num_rows, min_steps)
    tile = min(cap, target, num_rows)
    return max(8, (tile // 8) * 8)


@functools.partial(jax.jit, static_argnames=("train",))
def vpsde_forward(x, t, key, train=False):
    """Samples from the perturbation kernel p(x(t) | x).

    x   : (B, C, H, W) float   (NCHW, matching the PyTorch module)
    t   : (B,)         float
    key : PRNG key (replaces torch.randn_like)
    """
    B = x.shape[0]
    D = math.prod(x.shape[1:])                 # static Python int
    assert D % _LANE == 0, "event size must be a multiple of 128"  # TODO(synk)
    R = D // _LANE
    tile_r = _pick_tile_r(R)
    n_j = pl.cdiv(R, tile_r)

    x3d = x.reshape(B, R, _LANE)               # no dtype cast: free reshape
    tf = t.astype(jnp.float32)
    alpha = jnp.cos(ACOS_SQRT_ETA * tf) ** 2                    # mu(t),    (B,)
    sigma = jnp.sqrt(1.0 - alpha * alpha + ETA * ETA)           # sigma(t), (B,)
    eps3d = jax.random.normal(key, (B, R, _LANE), dtype=x3d.dtype)

    blk = lambda: pl.BlockSpec((None, tile_r, _LANE), lambda b, j: (b, j, 0))
    smem = lambda: pl.BlockSpec(memory_space=pltpu.MemorySpace.SMEM)

    xt3d = pl.pallas_call(
        _vpsde_kernel,
        out_shape=jax.ShapeDtypeStruct((B, R, _LANE), x.dtype),
        grid=(B, n_j),
        in_specs=[smem(), smem(), blk(), blk()],   # alpha, sigma, x, eps
        out_specs=blk(),
        compiler_params=pltpu.CompilerParams(
            dimension_semantics=("parallel", "parallel"),
        ),
    )(alpha, sigma, x3d, eps3d)

    xt = xt3d.reshape(x.shape)
    if train:
        return xt, eps3d.reshape(x.shape)      # exactly the eps the kernel used
    return xt


def vpsde_forward_ref(x, t, eps):
    """Pure-JAX reference of the PyTorch forward (given the noise eps)."""
    t = t.reshape(t.shape + (1,) * (x.ndim - 1))
    alpha = jnp.cos(ACOS_SQRT_ETA * t) ** 2
    sigma = jnp.sqrt(1.0 - alpha ** 2 + ETA ** 2)
    return alpha * x + sigma * eps


if __name__ == "__main__":
    key = jax.random.PRNGKey(0)
    kx, kt, keps = jax.random.split(key, 3)

    B, C, H, W = 2, 4, 16, 16          # event shape (C, H, W), D = 1024
    x = jax.random.normal(kx, (B, C, H, W), dtype=jnp.float32)
    t = jax.random.uniform(kt, (B,), dtype=jnp.float32)

    # train=True also returns the eps used, so we can verify x(t) against it.
    xt, eps = vpsde_forward(x, t, keps, train=True)
    xt = jax.block_until_ready(xt)
    eps = jax.block_until_ready(eps)

    assert xt.shape == x.shape and xt.dtype == x.dtype
    assert eps.shape == x.shape and eps.dtype == x.dtype
    assert bool(jnp.all(jnp.isfinite(xt))) and bool(jnp.all(jnp.isfinite(eps)))

    ref = vpsde_forward_ref(x, t, eps)
    err = float(jnp.max(jnp.abs(xt - ref)))
    assert err < 1e-5, f"max abs err {err}"

    # loose sanity on the Gaussian noise (2048 samples)
    m, s = float(jnp.mean(eps)), float(jnp.std(eps))
    assert abs(m) < 0.25 and 0.7 < s < 1.3, (m, s)

    # default (train=False) path returns just x(t); same key -> same result
    xt_only = jax.block_until_ready(vpsde_forward(x, t, keps))
    assert xt_only.shape == x.shape
    assert float(jnp.max(jnp.abs(xt_only - xt))) < 1e-6

    print("KERNEL_OK")
</pallas_src>

<mosaic_0001>
module attributes {stable_mosaic.version = 11 : i64} {
  func.func @_vpsde_kernel(%arg0: i32, %arg1: i32, %arg2: memref<2xf32, #tpu.memory_space<smem>>, %arg3: memref<2xf32, #tpu.memory_space<smem>>, %arg4: memref<1x8x128xf32, #tpu.memory_space<vmem>>, %arg5: memref<1x8x128xf32, #tpu.memory_space<vmem>>, %arg6: memref<1x8x128xf32, #tpu.memory_space<vmem>>) attributes {dimension_semantics = [#tpu.dimension_semantics<parallel>, #tpu.dimension_semantics<parallel>], iteration_bounds = array<i64: 2, 1>, scalar_prefetch = 0 : i64, scratch_operands = 0 : i64, tpu.core_type = #tpu.core_type<tc>, window_params = [{transform_indices = @transform_0, window_bounds = array<i64: 2>}, {transform_indices = @transform_1, window_bounds = array<i64: 2>}, {transform_indices = @transform_2, window_bounds = array<i64: 1, 8, 128>}, {transform_indices = @transform_3, window_bounds = array<i64: 1, 8, 128>}, {transform_indices = @transform_4, window_bounds = array<i64: 1, 8, 128>}]} {
    %0 = arith.index_cast %arg0 : i32 to index
    %1 = memref.load %arg2[%0] : memref<2xf32, #tpu.memory_space<smem>>
    %2 = arith.index_cast %arg0 : i32 to index
    %3 = memref.load %arg3[%2] : memref<2xf32, #tpu.memory_space<smem>>
    %c0 = arith.constant 0 : index
    %c0_0 = arith.constant 0 : index
    %c0_1 = arith.constant 0 : index
    %4 = vector.load %arg4[%c0, %c0_0, %c0_1] : memref<1x8x128xf32, #tpu.memory_space<vmem>>, vector<1x8x128xf32>
    %5 = vector.shape_cast %4 : vector<1x8x128xf32> to vector<8x128xf32>
    %c0_2 = arith.constant 0 : index
    %c0_3 = arith.constant 0 : index
    %c0_4 = arith.constant 0 : index
    %6 = vector.load %arg5[%c0_2, %c0_3, %c0_4] : memref<1x8x128xf32, #tpu.memory_space<vmem>>, vector<1x8x128xf32>
    %7 = vector.shape_cast %6 : vector<1x8x128xf32> to vector<8x128xf32>
    %8 = vector.broadcast %1 : f32 to vector<8x128xf32>
    %9 = arith.mulf %8, %5 : vector<8x128xf32>
    %10 = vector.broadcast %3 : f32 to vector<8x128xf32>
    %11 = arith.mulf %10, %7 : vector<8x128xf32>
    %12 = arith.addf %9, %11 : vector<8x128xf32>
    %c0_5 = arith.constant 0 : index
    %c0_6 = arith.constant 0 : index
    %c0_7 = arith.constant 0 : index
    %13 = vector.load %arg6[%c0_5, %c0_6, %c0_7] : memref<1x8x128xf32, #tpu.memory_space<vmem>>, vector<1x8x128xf32>
    %14 = vector.shape_cast %13 : vector<1x8x128xf32> to vector<8x128xf32>
    %15 = vector.shape_cast %12 : vector<8x128xf32> to vector<1x8x128xf32>
    tpu.vector_store %arg6[%c0_5, %c0_6, %c0_7], %15 {strides = array<i32>} : memref<1x8x128xf32, #tpu.memory_space<vmem>>, vector<1x8x128xf32>,
    return
  }
  func.func @transform_0(%arg0: i32, %arg1: i32) -> i32 {
    %c0_i32 = arith.constant 0 : i32
    %c0_i32_0 = arith.constant 0 : i32
    return %c0_i32 : i32
  }
  func.func @transform_1(%arg0: i32, %arg1: i32) -> i32 {
    %c0_i32 = arith.constant 0 : i32
    %c0_i32_0 = arith.constant 0 : i32
    return %c0_i32 : i32
  }
  func.func @transform_2(%arg0: i32, %arg1: i32) -> (i32, i32, i32) {
    %c0_i32 = arith.constant 0 : i32
    %c0_i32_0 = arith.constant 0 : i32
    return %arg0, %arg1, %c0_i32 : i32, i32, i32
  }
  func.func @transform_3(%arg0: i32, %arg1: i32) -> (i32, i32, i32) {
    %c0_i32 = arith.constant 0 : i32
    %c0_i32_0 = arith.constant 0 : i32
    return %arg0, %arg1, %c0_i32 : i32, i32, i32
  }
  func.func @transform_4(%arg0: i32, %arg1: i32) -> (i32, i32, i32) {
    %c0_i32 = arith.constant 0 : i32
    %c0_i32_0 = arith.constant 0 : i32
    return %arg0, %arg1, %c0_i32 : i32, i32, i32
  }
}

</mosaic_0001>

<llo_original>
// kernel: vpsde_forward.1
$region0: #{vpsde_forward.1}
  #allocation0 [shape = 'u32[]', space=smem, size = 0x4, offset = 0x4, fixed_abs, tag = 'smem constant byte address 0x4 - core index']
  #allocation1 [shape = 'u32[144,128]{1,0:T(1,128)}', space=vmem, size = 0x12000, scoped, tag = 'internal scratch']
  %s0 = inlined_call_operand.vmem [shape: f32[2], index: 0, kind: input, shape index: {}]
  %s1 = inlined_call_operand.vmem [shape: f32[2], index: 1, kind: input, shape index: {}]
  %s2 = inlined_call_operand.vmem [shape: f32[2,8,128], index: 2, kind: input, shape index: {}]
  %s3 = inlined_call_operand.vmem [shape: f32[2,8,128], index: 3, kind: input, shape index: {}]
  %s4 = inlined_call_operand.vmem [shape: f32[2,8,128], index: 4, kind: output, shape index: {}]
  %s5 = sld [smem:[#allocation0]]
  $region57: #{vpsde_forward.1} parent=0
    _
  %s7 = ssub.s32 1, %s5
  %s8 = scalar_select 0, %s7, %s5
  $region1: #{vpsde_forward.1} parent=0
    #allocation2 [shape = 'u8[512]{0}', space=smem, size = 0x200, scoped, tag = 'input window, operand 0, single buffered']
    #allocation3 [shape = 's32[2]{0}', space=sflag, size = 0x8, scoped, tag = 'scoped memory for vpsde_forward.1']
    #allocation4 [shape = 'u8[512]{0}', space=smem, size = 0x200, scoped, tag = 'input window, operand 1, single buffered']
    #allocation5 [shape = 's32[1]{0}', space=sflag, size = 0x4, scoped, tag = 'scoped memory for vpsde_forward.1']
    %9 = vsyncpa [#allocation3], 0
    %10 = vsyncpa [#allocation5], 0
    loop: start=0, step=1, limit=4
    $region2: #{vpsde_forward.1} parent=1 // loop_pre_header
      _
    $region3: #{vpsde_forward.1} parent=1 // loop_header
      %s12 = sphi 0, %s16
      %p13 = scmp.ge.s32.totalorder %s12, 4
      %s19 = sphi 0, %s31
      %s20 = sphi 0, %s27
      %s21 = sphi 0, %s19
      %s22 = sphi 0, %s20
      %s23 = sphi 0, %s21
      %s24 = sphi 0, %s22
      %s32 = sphi 0, %s32
      %s34 = sphi 0, %s32
      %s35 = sphi 0, %s34
      %s49 = sphi 0, %s35
      %s53 = sphi 0, %s53
      %s55 = sphi 0, %s53
      %s56 = sphi 0, %s55
      %s70 = sphi 0, %s56
      %s78 = sphi 0, %s80
      %s81 = sphi 0, %s78
      %s82 = sphi 0, %s81
      %s98 = sphi 0, %s82
      %s106 = sphi 0, %s108
      %s109 = sphi 0, %s106
      %s110 = sphi 0, %s109
      %s126 = sphi 0, %s110
      %s134 = sphi 0, %s136
      %s137 = sphi 0, %s134
      %s138 = sphi 0, %s137
      %s154 = sphi 0, %s138
    $region4: #{vpsde_forward.1} parent=1 // loop_header_branch
      %15 = sbr.rel (%p13) target = $region8
    $region5: #{vpsde_forward.1} parent=1 // loop_body
      %s17 = ssub.s32 %s12, 1
      %s18 = ssub.s32 %s12, 2
      %s25 = sadd.s32 1, %s20
      %p26 = scmp.ge.s32.totalorder %s25, 1
      %s27 = scalar_select %p26, 0, %s25
      %s28 = sadd.s32 1, %s19
      %s29 = scalar_select %p26, %s28, %s19
      %p30 = scmp.ge.s32.totalorder %s29, 2
      %s31 = scalar_select %p30, 0, %s29
      %s33 = sadd.s32 %s32, 1
      %p36 = scmp.eq.s32.totalorder %s12, 1
      %p37 = scmp.ne.s32.totalorder %s32, %s34
      %p38 = scmp.eq.s32.totalorder %s12, 0
      %p39 = por %p37, %p38
      %p40 = scmp.ne.s32.totalorder %s32, %s34
      %p41 = scmp.eq.s32.totalorder %s17, 1
      %p42 = por %p40, %p41
      %p43 = scmp.ne.s32.totalorder %s34, %s35
      %p44 = scmp.eq.s32.totalorder %s17, 0
      %p45 = por %p43, %p44
      %p46 = scmp.ne.s32.totalorder %s34, %s35
      %p47 = scmp.eq.s32.totalorder %s18, 1
      %p48 = por %p46, %p47
      %p50 = scmp.ne.s32.totalorder %s35, %s49
      %p51 = scmp.eq.s32.totalorder %s18, 0
      %p52 = por %p50, %p51
      %s54 = sadd.s32 %s53, 1
      %p57 = scmp.eq.s32.totalorder %s12, 1
      %p58 = scmp.ne.s32.totalorder %s53, %s55
      %p59 = scmp.eq.s32.totalorder %s12, 0
      %p60 = por %p58, %p59
      %p61 = scmp.ne.s32.totalorder %s53, %s55
      %p62 = scmp.eq.s32.totalorder %s17, 1
      %p63 = por %p61, %p62
      %p64 = scmp.ne.s32.totalorder %s55, %s56
      %p65 = scmp.eq.s32.totalorder %s17, 0
      %p66 = por %p64, %p65
      %p67 = scmp.ne.s32.totalorder %s55, %s56
      %p68 = scmp.eq.s32.totalorder %s18, 1
      %p69 = por %p67, %p68
      %p71 = scmp.ne.s32.totalorder %s56, %s70
      %p72 = scmp.eq.s32.totalorder %s18, 0
      %p73 = por %p71, %p72
      %s74 = ssub.s32 %s19, %s31
      %s75 = ssub.s32 %s20, %s27
      %s76 = sor.u32 %s74, %s75
      %p77 = scmp.eq.s32.totalorder %s76, 0
      %s79 = sadd.s32 %s78, 1
      %s80 = scalar_select %p77, %s78, %s79
      %p83 = pneg %p77
      %p84 = scmp.eq.s32.totalorder %s12, 1
      %p85 = por %p83, %p84
      %p86 = scmp.ne.s32.totalorder %s78, %s81
      %p87 = scmp.eq.s32.totalorder %s12, 0
      %p88 = por %p86, %p87
      %p89 = scmp.ne.s32.totalorder %s78, %s81
      %p90 = scmp.eq.s32.totalorder %s17, 1
      %p91 = por %p89, %p90
      %p92 = scmp.ne.s32.totalorder %s81, %s82
      %p93 = scmp.eq.s32.totalorder %s17, 0
      %p94 = por %p92, %p93
      %p95 = scmp.ne.s32.totalorder %s81, %s82
      %p96 = scmp.eq.s32.totalorder %s18, 1
      %p97 = por %p95, %p96
      %p99 = scmp.ne.s32.totalorder %s82, %s98
      %p100 = scmp.eq.s32.totalorder %s18, 0
      %p101 = por %p99, %p100
      %s102 = ssub.s32 %s19, %s31
      %s103 = ssub.s32 %s20, %s27
      %s104 = sor.u32 %s102, %s103
      %p105 = scmp.eq.s32.totalorder %s104, 0
      %s107 = sadd.s32 %s106, 1
      %s108 = scalar_select %p105, %s106, %s107
      %p111 = pneg %p105
      %p112 = scmp.eq.s32.totalorder %s12, 1
      %p113 = por %p111, %p112
      %p114 = scmp.ne.s32.totalorder %s106, %s109
      %p115 = scmp.eq.s32.totalorder %s12, 0
      %p116 = por %p114, %p115
      %p117 = scmp.ne.s32.totalorder %s106, %s109
      %p118 = scmp.eq.s32.totalorder %s17, 1
      %p119 = por %p117, %p118
      %p120 = scmp.ne.s32.totalorder %s109, %s110
      %p121 = scmp.eq.s32.totalorder %s17, 0
      %p122 = por %p120, %p121
      %p123 = scmp.ne.s32.totalorder %s109, %s110
      %p124 = scmp.eq.s32.totalorder %s18, 1
      %p125 = por %p123, %p124
      %p127 = scmp.ne.s32.totalorder %s110, %s126
      %p128 = scmp.eq.s32.totalorder %s18, 0
      %p129 = por %p127, %p128
      %s130 = ssub.s32 %s19, %s31
      %s131 = ssub.s32 %s20, %s27
      %s132 = sor.u32 %s130, %s131
      %p133 = scmp.eq.s32.totalorder %s132, 0
      %s135 = sadd.s32 %s134, 1
      %s136 = scalar_select %p133, %s134, %s135
      %p139 = pneg %p133
      %p140 = scmp.eq.s32.totalorder %s12, 1
      %p141 = por %p139, %p140
      %p142 = scmp.ne.s32.totalorder %s134, %s137
      %p143 = scmp.eq.s32.totalorder %s12, 0
      %p144 = por %p142, %p143
      %p145 = scmp.ne.s32.totalorder %s134, %s137
      %p146 = scmp.eq.s32.totalorder %s17, 1
      %p147 = por %p145, %p146
      %p148 = scmp.ne.s32.totalorder %s137, %s138
      %p149 = scmp.eq.s32.totalorder %s17, 0
      %p150 = por %p148, %p149
      %p151 = scmp.ne.s32.totalorder %s137, %s138
      %p152 = scmp.eq.s32.totalorder %s18, 1
      %p153 = por %p151, %p152
      %p155 = scmp.ne.s32.totalorder %s138, %s154
      %p156 = scmp.eq.s32.totalorder %s18, 0
      %p157 = por %p155, %p156
      %p158 = scmp.le.s32.totalorder 1, %s12
      %p159 = scmp.lt.s32.totalorder %s12, 3
      %p160 = pnand %p158, %p159
      %p161 = pneg %p160
      // Predicated region
      $region9: #{vpsde_forward.1} parent=5 // pred_check
        _
      $region10: #{vpsde_forward.1} parent=5 // pred_check_branch
        %163 = sbr.rel (%p160) target = $region12
      $region11: #{vpsde_forward.1} parent=5 // pred_region
        %s164 = ssub.s32 %s12, 1
        // Predicated region
        $region13: #{vpsde_forward.1} parent=11 // pred_check
          %p165 = pneg %p45
        $region14: #{vpsde_forward.1} parent=11 // pred_check_branch
          %167 = sbr.rel (%p165) target = $region16
        $region15: #{vpsde_forward.1} parent=11 // pred_region
          %s169 = ssub.s32 16, 16
          %170 = vsyncadd [#allocation3], %s169
          %s172 = sshll.u32 %s0, 4
          %s173 = int_to_ptr.vmem [resolvable:$true] %s172
          %175 = dma.vmem_to_smem %s173, 16, [#allocation2], [#allocation3]
        $region16: #{vpsde_forward.1} parent=11 // pred_fallthru
          _
        // Predicated region
        $region17: #{vpsde_forward.1} parent=11 // pred_check
          %p176 = pneg %p66
        $region18: #{vpsde_forward.1} parent=11 // pred_check_branch
          %178 = sbr.rel (%p176) target = $region20
        $region19: #{vpsde_forward.1} parent=11 // pred_region
          %s180 = ssub.s32 16, 16
          %181 = vsyncadd [#allocation5], %s180
          %s183 = sshll.u32 %s1, 4
          %s184 = int_to_ptr.vmem [resolvable:$true] %s183
          %186 = dma.vmem_to_smem %s184, 16, [#allocation4], [#allocation5]
        $region20: #{vpsde_forward.1} parent=11 // pred_fallthru
          _
      $region12: #{vpsde_forward.1} parent=5 // pred_fallthru
        _
      %p187 = scmp.lt.s32.totalorder %s12, 2
      // Predicated region
      $region21: #{vpsde_forward.1} parent=5 // pred_check
        %p188 = pneg %p187
      $region22: #{vpsde_forward.1} parent=5 // pred_check_branch
        %190 = sbr.rel (%p188) target = $region24
      $region23: #{vpsde_forward.1} parent=5 // pred_region
        // Predicated region
        $region25: #{vpsde_forward.1} parent=23 // pred_check
          %p191 = pneg %p88
        $region26: #{vpsde_forward.1} parent=23 // pred_check_branch
          %193 = sbr.rel (%p191) target = $region28
        $region27: #{vpsde_forward.1} parent=23 // pred_region
          %p194 = scmp.lt.s32.totalorder %s19, 1
          %s195 = scalar_select %p194, %s19, 1
          %p196 = scmp.lt.s32.totalorder %s20, 0
          %s197 = scalar_select %p196, %s20, 0
          %s198 = sadd.s32 %s197, %s195
          %s199 = smul.addr %s198, 8
          %s200 = scalar_lea.vmem %s2, %s199
        $region28: #{vpsde_forward.1} parent=23 // pred_fallthru
          _
        // Predicated region
        $region29: #{vpsde_forward.1} parent=23 // pred_check
          %p201 = pneg %p116
        $region30: #{vpsde_forward.1} parent=23 // pred_check_branch
          %203 = sbr.rel (%p201) target = $region32
        $region31: #{vpsde_forward.1} parent=23 // pred_region
          %p204 = scmp.lt.s32.totalorder %s19, 1
          %s205 = scalar_select %p204, %s19, 1
          %p206 = scmp.lt.s32.totalorder %s20, 0
          %s207 = scalar_select %p206, %s20, 0
          %s208 = sadd.s32 %s207, %s205
          %s209 = smul.addr %s208, 8
          %s210 = scalar_lea.vmem %s3, %s209
        $region32: #{vpsde_forward.1} parent=23 // pred_fallthru
          _
      $region24: #{vpsde_forward.1} parent=5 // pred_fallthru
        _
      %p211 = scmp.le.s32.totalorder 1, %s12
      %p212 = scmp.lt.s32.totalorder %s12, 3
      %p213 = pnand %p211, %p212
      %p214 = pneg %p213
      // Predicated region
      $region33: #{vpsde_forward.1} parent=5 // pred_check
        _
      $region34: #{vpsde_forward.1} parent=5 // pred_check_branch
        %216 = sbr.rel (%p213) target = $region36
      $region35: #{vpsde_forward.1} parent=5 // pred_region
        %s217 = ssub.s32 %s12, 1
        // Predicated region
        $region37: #{vpsde_forward.1} parent=35 // pred_check
          %p218 = pneg %p45
        $region38: #{vpsde_forward.1} parent=35 // pred_check_branch
          %220 = sbr.rel (%p218) target = $region40
        $region39: #{vpsde_forward.1} parent=35 // pred_region
          %221 = dma.done [#allocation3], 16
        $region40: #{vpsde_forward.1} parent=35 // pred_fallthru
          _
        // Predicated region
        $region41: #{vpsde_forward.1} parent=35 // pred_check
          %p222 = pneg %p66
        $region42: #{vpsde_forward.1} parent=35 // pred_check_branch
          %224 = sbr.rel (%p222) target = $region44
        $region43: #{vpsde_forward.1} parent=35 // pred_region
          %225 = dma.done [#allocation5], 16
        $region44: #{vpsde_forward.1} parent=35 // pred_fallthru
          _
        %226 = sfence
        %p227 = pneg %p45
        %p228 = pneg %p42
        %p229 = pneg %p66
        %p230 = pneg %p63
        %p231 = scmp.lt.s32.totalorder %s21, 1
        %s232 = scalar_select %p231, %s21, 1
        %p233 = scmp.lt.s32.totalorder %s22, 0
        %s234 = scalar_select %p233, %s22, 0
        %s235 = sadd.s32 %s234, %s232
        %s236 = smul.addr %s235, 8
        %s237 = scalar_lea.vmem %s2, %s236
        %p238 = pneg %p94
        %p239 = pneg %p91
        %p240 = scmp.lt.s32.totalorder %s21, 1
        %s241 = scalar_select %p240, %s21, 1
        %p242 = scmp.lt.s32.totalorder %s22, 0
        %s243 = scalar_select %p242, %s22, 0
        %s244 = sadd.s32 %s243, %s241
        %s245 = smul.addr %s244, 8
        %s246 = scalar_lea.vmem %s3, %s245
        %p247 = pneg %p122
        %p248 = pneg %p119
        %p249 = pneg %p150
        %p250 = pneg %p147
        %p251 = scmp.lt.s32.totalorder %s21, 1
        %s252 = scalar_select %p251, %s21, 1
        %p253 = scmp.lt.s32.totalorder %s22, 0
        %s254 = scalar_select %p253, %s22, 0
        %s255 = sadd.s32 %s254, %s252
        %s256 = smul.addr %s255, 8
        %s257 = scalar_lea.vmem %s4, %s256
        %p258 = scmp.lt.s32.totalorder %s21, 1
        %s259 = scalar_select %p258, %s21, 1
        %p260 = scmp.lt.s32.totalorder %s22, 0
        %s261 = scalar_select %p260, %s22, 0
        %s262 = sadd.s32 %s261, %s259
        %s263 = smul.addr %s262, 8
        %s264 = scalar_lea.vmem %s2, %s263
        %p265 = scmp.lt.s32.totalorder %s21, 1
        %s266 = scalar_select %p265, %s21, 1
        %p267 = scmp.lt.s32.totalorder %s22, 0
        %s268 = scalar_select %p267, %s22, 0
        %s269 = sadd.s32 %s268, %s266
        %s270 = smul.addr %s269, 8
        %s271 = scalar_lea.vmem %s3, %s270
        %p272 = scmp.lt.s32.totalorder %s21, 1
        %s273 = scalar_select %p272, %s21, 1
        %p274 = scmp.lt.s32.totalorder %s22, 0
        %s275 = scalar_select %p274, %s22, 0
        %s276 = sadd.s32 %s275, %s273
        %s277 = smul.addr %s276, 8
        %s278 = scalar_lea.vmem %s4, %s277
        %s279 = sld [smem:[#allocation2 + %s21]]
        %s280 = sld [smem:[#allocation4 + %s21]]
        %v281 = vld [vmem:[%s264] sm:$0xff]
        %v282 = vld [vmem:[%s271] sm:$0xff]
        %v283 = vstv %s279
        %v284 = vmul.f32 %v283, %v281
        %v285 = vstv %s280
        %v286 = vmul.f32 %v285, %v282
        %v287 = vadd.f32 %v284, %v286
        %288 = vst [vmem:[%s278] sm:$0xff] %v287
        %p289 = scmp.lt.s32.totalorder %s21, 1
        %s290 = scalar_select %p289, %s21, 1
        %p291 = scmp.lt.s32.totalorder %s22, 0
        %s292 = scalar_select %p291, %s22, 0
        %s293 = sadd.s32 %s292, %s290
        %s294 = smul.addr %s293, 8
        %s295 = scalar_lea.vmem %s4, %s294
        // Predicated region
        $region45: #{vpsde_forward.1} parent=35 // pred_check
          %p296 = pneg %p147
        $region46: #{vpsde_forward.1} parent=35 // pred_check_branch
          %298 = sbr.rel (%p296) target = $region48
        $region47: #{vpsde_forward.1} parent=35 // pred_region
          _
        $region48: #{vpsde_forward.1} parent=35 // pred_fallthru
          _
      $region36: #{vpsde_forward.1} parent=5 // pred_fallthru
        _
      %p299 = scmp.le.s32.totalorder 2, %s12
      // Predicated region
      $region49: #{vpsde_forward.1} parent=5 // pred_check
        %p300 = pneg %p299
      $region50: #{vpsde_forward.1} parent=5 // pred_check_branch
        %302 = sbr.rel (%p300) target = $region52
      $region51: #{vpsde_forward.1} parent=5 // pred_region
        %s303 = ssub.s32 %s12, 2
        // Predicated region
        $region53: #{vpsde_forward.1} parent=51 // pred_check
          %p304 = pneg %p153
        $region54: #{vpsde_forward.1} parent=51 // pred_check_branch
          %306 = sbr.rel (%p304) target = $region56
        $region55: #{vpsde_forward.1} parent=51 // pred_region
          %p307 = scmp.lt.s32.totalorder %s23, 1
          %s308 = scalar_select %p307, %s23, 1
          %p309 = scmp.lt.s32.totalorder %s24, 0
          %s310 = scalar_select %p309, %s24, 0
          %s311 = sadd.s32 %s310, %s308
          %s312 = smul.addr %s311, 8
          %s313 = scalar_lea.vmem %s4, %s312
        $region56: #{vpsde_forward.1} parent=51 // pred_fallthru
          _
      $region52: #{vpsde_forward.1} parent=5 // pred_fallthru
        _
    $region6: #{vpsde_forward.1} parent=1 // loop_footer
      %s16 = sadd.s32 1, %s12
    $region7: #{vpsde_forward.1} parent=1 // loop_footer_branch
      %11 = sbr.rel target = $region3
    $region8: #{vpsde_forward.1} parent=1 // loop_exit
      _
    %314 = vsyncpa [#allocation3], 1
    %s315 = scalar_lea.sflag [#allocation3], 1
    %316 = vsyncpa %s315, 1
    %317 = vsyncpa [#allocation5], 1

</llo_original>
